<compile_context>
chip_gen: v6e
topology: v6e:2x2x1
jax: 0.10.0
libtpu: 0.0.40
codegen_flags: <defaults>
</compile_context>

<pallas_src>
import functools

import jax
import jax.numpy as jnp
from jax.experimental import pallas as pl
from jax.experimental.pallas import tpu as pltpu


def _cdiv(a, b):
    return -(-a // b)


def _round_up(a, b):
    return _cdiv(a, b) * b


def _lane_seg_loss_kernel(weights_ref, logits_ref, gt_ref, out_ref, *,
                          num_classes, has_tail):
    """One H-stripe: logits (C, TH, W), gt (TH, W) -> out (1, 3, W) partials."""
    gt = gt_ref[...]                      # native integer dtype

    def plane(c):
        return logits_ref[c].astype(jnp.float32)   # cast after VMEM load (VPU)

    if num_classes <= 8:
        # Small class count: cache the f32 planes (cheap on vregs). For large C
        # we re-read VMEM instead of holding all planes live (vld is not the
        # bottleneck; live-range pressure is).
        _cached = [plane(c) for c in range(num_classes)]
        plane = lambda c: _cached[c]      # noqa: E731

    # pass 1: per-pixel max over the (small, statically unrolled) class axis
    m = plane(0)
    for c in range(1, num_classes):
        m = jnp.maximum(m, plane(c))

    # pass 2: softmax denominator + target-class exp/logit + per-pixel weight
    s = jnp.zeros_like(m)
    e_t = jnp.zeros_like(m)
    x_t = jnp.zeros_like(m)
    w = jnp.zeros_like(m)
    for c in range(num_classes):
        xc = plane(c)
        e = jnp.exp(xc - m)
        s = s + e
        is_c = gt == c
        e_t = jnp.where(is_c, e, e_t)
        x_t = jnp.where(is_c, xc, x_t)
        w = jnp.where(is_c, weights_ref[c], w)     # per-class weight from SMEM

    nll = (m - x_t) + jnp.log(s)          # logsumexp - target logit
    # pt = e_t / s via fast reciprocal + one Newton step (instead of exp(-nll)):
    # EUP only does a vrcp, accuracy stays ~f32 for the tolerance check.
    r = pl.reciprocal(s, approx=True)
    r = r * (2.0 - s * r)
    pt = e_t * r
    one_m_pt = 1.0 - pt

    w_nll = w * nll
    focal = one_m_pt * one_m_pt * w_nll

    if has_tail:
        # The last H-stripe reads past H; those rows hold whatever was in the
        # VMEM buffer and can become inf/NaN through exp/log.  gt is padded
        # with the out-of-range class there, so w == 0, and a *select* (not a
        # multiply) drops them without NaN leakage.  Pixels of a zero-weight
        # class contribute 0 either way, matching the torch reference.
        valid = w > 0.0
        w_nll = jnp.where(valid, w_nll, 0.0)
        focal = jnp.where(valid, focal, 0.0)

    # Sublane-only partial sums: keep the W-lane vectors, finish the tiny
    # (num_blocks, W) cross-lane reduction in the wrapper.
    out_ref[0, 0:1, :] = jnp.sum(w_nll, axis=0, keepdims=True)
    out_ref[0, 1:2, :] = jnp.sum(w, axis=0, keepdims=True)
    out_ref[0, 2:3, :] = jnp.sum(focal, axis=0, keepdims=True)


def _choose_tile(num_classes, H, W, logit_bytes, label_bytes):
    """Pick the H-stripe height: large (amortize per-step overhead), VMEM-aware."""
    SUB = 32                                   # sublane multiple safe for f32/bf16/int8
    w_lanes = _round_up(max(W, 1), 128)        # lane-padded width as laid out in VMEM
    # double-buffered inputs + ~12 live f32 (TH, W) intermediates, per stripe row
    per_row = 2 * w_lanes * (num_classes * logit_bytes + label_bytes) + 12 * w_lanes * 4
    th_max = (28 * 1024 * 1024) // per_row              # stay well under the scoped limit
    th_max = min(th_max, max(1, (1024 * 128) // w_lanes))  # ~128K elems per class plane
    if th_max >= H:
        return H, 1
    th_max = max(SUB, (th_max // SUB) * SUB)
    nb = _cdiv(H, th_max)
    if nb > 1 and nb % 2 == 1:
        nb += 1                        # prefer an even block count (v7x 2-TC megacore)
    th = _round_up(_cdiv(H, nb), SUB)  # rebalance stripes given the block count
    if th >= H:
        return H, 1
    return th, _cdiv(H, th)


def lane_segmentation_loss(pred_lane_seg, gt_lane_seg, class_weights=None):
    """pred_lane_seg: (C, H, W) logits (any float dtype); gt_lane_seg: (H, W) ints or None."""
    if gt_lane_seg is None:            # mirrors the torch module's early exit
        z = jnp.float32(0.0)
        return {'total_loss': z, 'seg_loss': z}

    C, H, W = pred_lane_seg.shape
    M = H * W

    if class_weights is None:
        class_weights = jnp.ones((C,), jnp.float32).at[0].set(0.1)
    class_weights = jnp.asarray(class_weights, jnp.float32)

    logit_bytes = jnp.dtype(pred_lane_seg.dtype).itemsize
    label_bytes = jnp.dtype(gt_lane_seg.dtype).itemsize
    th, nb = _choose_tile(C, H, W, logit_bytes, label_bytes)

    # Only the tiny label map is padded (with the out-of-range class C, so the
    # padded pixels carry weight 0).  The logits are passed through untouched.
    gt = gt_lane_seg
    pad_h = nb * th - H
    if pad_h:
        gt = jnp.pad(gt, ((0, pad_h), (0, 0)), constant_values=C)

    kernel = functools.partial(_lane_seg_loss_kernel, num_classes=C,
                               has_tail=(pad_h != 0))

    stats = pl.pallas_call(
        kernel,
        out_shape=jax.ShapeDtypeStruct((nb, 3, W), jnp.float32),
        grid_spec=pltpu.PrefetchScalarGridSpec(
            num_scalar_prefetch=0,
            grid=(nb,),
            in_specs=[
                pl.BlockSpec(memory_space=pltpu.MemorySpace.SMEM),   # (C,) class weights
                pl.BlockSpec((C, th, W), lambda i: (0, i, 0)),       # logits H-stripe
                pl.BlockSpec((th, W), lambda i: (i, 0)),             # label H-stripe
            ],
            out_specs=pl.BlockSpec((1, 3, W), lambda i: (i, 0, 0)),
        ),
        compiler_params=pltpu.CompilerParams(
            dimension_semantics=("parallel",),
            vmem_limit_bytes=48 * 1024 * 1024),
    )(class_weights, pred_lane_seg, gt)

    # tiny final reduction over per-block, per-lane partials
    sums = jnp.sum(stats, axis=(0, 2))                  # (3,)
    ce_loss = sums[0] / jnp.maximum(sums[1], 1e-12)     # torch weighted 'mean'
    focal_loss = sums[2] / jnp.float32(M)               # plain mean over H*W pixels
    total = 0.7 * ce_loss + 0.3 * focal_loss
    return {'total_loss': total, 'seg_loss': total}


# ------------------------- pure-JAX reference -------------------------
def lane_segmentation_loss_ref(pred, gt, class_weights=None):
    C, H, W = pred.shape
    if class_weights is None:
        class_weights = jnp.ones((C,), jnp.float32).at[0].set(0.1)
    pred = pred.astype(jnp.float32)
    gt = gt.astype(jnp.int32)

    logp = jax.nn.log_softmax(pred, axis=0)                      # (C,H,W)
    onehot = jnp.transpose(jax.nn.one_hot(gt, C, dtype=jnp.float32), (2, 0, 1))
    nll = -jnp.sum(onehot * logp, axis=0)                        # (H,W)
    w = class_weights[gt]                                        # (H,W)

    ce_loss = jnp.sum(w * nll) / jnp.sum(w)                      # torch weighted 'mean'
    pt = jnp.sum(onehot * jnp.exp(logp), axis=0)
    focal = (1.0 - pt) ** 2 * (w * nll)
    focal_loss = jnp.mean(focal)
    total = 0.7 * ce_loss + 0.3 * focal_loss
    return {'total_loss': total, 'seg_loss': total}


if __name__ == "__main__":
    key = jax.random.PRNGKey(0)

    # (C, H, W, logits dtype, label dtype)
    cases = [
        (4, 64, 64, jnp.float32, jnp.int32),     # small, single full-array block, W < 128
        (5, 300, 180, jnp.float32, jnp.int32),   # ragged W lanes, H not a multiple of 8
        (3, 520, 168, jnp.bfloat16, jnp.uint8),  # bf16 logits + uint8 labels, 2 blocks, ragged tail
        (2, 1044, 256, jnp.float32, jnp.int32),  # odd->even block-count adjust, ragged tail
    ]
    for idx, (C, H, W, ldt, gdt) in enumerate(cases):
        k1, k2, key = jax.random.split(key, 3)
        pred_lane_seg = (2.0 * jax.random.normal(k1, (C, H, W), dtype=jnp.float32)).astype(ldt)
        gt_lane_seg = jax.random.randint(k2, (H, W), 0, C).astype(gdt)

        out = jax.block_until_ready(lane_segmentation_loss(pred_lane_seg, gt_lane_seg))
        ref = lane_segmentation_loss_ref(pred_lane_seg.astype(jnp.float32), gt_lane_seg)

        for name in ('total_loss', 'seg_loss'):
            if not jnp.allclose(out[name], ref[name], rtol=5e-4, atol=1e-5):
                raise AssertionError(
                    f"case {idx} mismatch for {name}: kernel={out[name]} ref={ref[name]}")

    # None-targets early-exit branch (mirrors the torch module)
    z = lane_segmentation_loss(pred_lane_seg, None)
    assert float(z['total_loss']) == 0.0

    print("KERNEL_OK")
</pallas_src>

<mosaic_0001>
module attributes {stable_mosaic.version = 11 : i64} {
  func.func @_lane_seg_loss_kernel(%arg0: i32, %arg1: memref<4xf32, #tpu.memory_space<smem>>, %arg2: memref<4x64x64xf32, #tpu.memory_space<vmem>>, %arg3: memref<64x64xi32, #tpu.memory_space<vmem>>, %arg4: memref<1x3x64xf32, #tpu.memory_space<vmem>>) attributes {dimension_semantics = [#tpu.dimension_semantics<parallel>], iteration_bounds = array<i64: 1>, scalar_prefetch = 0 : i64, scratch_operands = 0 : i64, tpu.core_type = #tpu.core_type<tc>, window_params = [{transform_indices = @transform_0, window_bounds = array<i64: 4>}, {transform_indices = @transform_1, window_bounds = array<i64: 4, 64, 64>}, {transform_indices = @transform_2, window_bounds = array<i64: 64, 64>}, {transform_indices = @transform_3, window_bounds = array<i64: 1, 3, 64>}]} {
    %c0 = arith.constant 0 : index
    %c0_0 = arith.constant 0 : index
    %0 = vector.load %arg3[%c0, %c0_0] : memref<64x64xi32, #tpu.memory_space<vmem>>, vector<64x64xi32>
    %c0_1 = arith.constant 0 : index
    %c0_2 = arith.constant 0 : index
    %c0_3 = arith.constant 0 : index
    %1 = vector.load %arg2[%c0_1, %c0_2, %c0_3] : memref<4x64x64xf32, #tpu.memory_space<vmem>>, vector<1x64x64xf32>
    %2 = vector.shape_cast %1 : vector<1x64x64xf32> to vector<64x64xf32>
    %c1 = arith.constant 1 : index
    %c0_4 = arith.constant 0 : index
    %c0_5 = arith.constant 0 : index
    %3 = vector.load %arg2[%c1, %c0_4, %c0_5] : memref<4x64x64xf32, #tpu.memory_space<vmem>>, vector<1x64x64xf32>
    %4 = vector.shape_cast %3 : vector<1x64x64xf32> to vector<64x64xf32>
    %c2 = arith.constant 2 : index
    %c0_6 = arith.constant 0 : index
    %c0_7 = arith.constant 0 : index
    %5 = vector.load %arg2[%c2, %c0_6, %c0_7] : memref<4x64x64xf32, #tpu.memory_space<vmem>>, vector<1x64x64xf32>
    %6 = vector.shape_cast %5 : vector<1x64x64xf32> to vector<64x64xf32>
    %c3 = arith.constant 3 : index
    %c0_8 = arith.constant 0 : index
    %c0_9 = arith.constant 0 : index
    %7 = vector.load %arg2[%c3, %c0_8, %c0_9] : memref<4x64x64xf32, #tpu.memory_space<vmem>>, vector<1x64x64xf32>
    %8 = vector.shape_cast %7 : vector<1x64x64xf32> to vector<64x64xf32>
    %9 = arith.maximumf %2, %4 : vector<64x64xf32>
    %10 = arith.maximumf %9, %6 : vector<64x64xf32>
    %11 = arith.maximumf %10, %8 : vector<64x64xf32>
    %cst = arith.constant 0.000000e+00 : f32
    %12 = vector.broadcast %cst : f32 to vector<64x64xf32>
    %cst_10 = arith.constant 0.000000e+00 : f32
    %13 = vector.broadcast %cst_10 : f32 to vector<64x64xf32>
    %cst_11 = arith.constant 0.000000e+00 : f32
    %14 = vector.broadcast %cst_11 : f32 to vector<64x64xf32>
    %cst_12 = arith.constant 0.000000e+00 : f32
    %15 = vector.broadcast %cst_12 : f32 to vector<64x64xf32>
    %16 = arith.subf %2, %11 : vector<64x64xf32>
    %17 = math.exp %16 : vector<64x64xf32>
    %18 = arith.addf %12, %17 : vector<64x64xf32>
    %c0_i32 = arith.constant 0 : i32
    %19 = vector.broadcast %c0_i32 : i32 to vector<64x64xi32>
    %20 = arith.cmpi eq, %0, %19 : vector<64x64xi32>
    %21 = arith.select %20, %17, %13 : vector<64x64xi1>, vector<64x64xf32>
    %22 = arith.select %20, %2, %14 : vector<64x64xi1>, vector<64x64xf32>
    %c0_13 = arith.constant 0 : index
    %23 = memref.load %arg1[%c0_13] : memref<4xf32, #tpu.memory_space<smem>>
    %24 = vector.broadcast %23 : f32 to vector<64x64xf32>
    %25 = arith.select %20, %24, %15 : vector<64x64xi1>, vector<64x64xf32>
    %26 = arith.subf %4, %11 : vector<64x64xf32>
    %27 = math.exp %26 : vector<64x64xf32>
    %28 = arith.addf %18, %27 : vector<64x64xf32>
    %c1_i32 = arith.constant 1 : i32
    %29 = vector.broadcast %c1_i32 : i32 to vector<64x64xi32>
    %30 = arith.cmpi eq, %0, %29 : vector<64x64xi32>
    %31 = arith.select %30, %27, %21 : vector<64x64xi1>, vector<64x64xf32>
    %32 = arith.select %30, %4, %22 : vector<64x64xi1>, vector<64x64xf32>
    %c1_14 = arith.constant 1 : index
    %33 = memref.load %arg1[%c1_14] : memref<4xf32, #tpu.memory_space<smem>>
    %34 = vector.broadcast %33 : f32 to vector<64x64xf32>
    %35 = arith.select %30, %34, %25 : vector<64x64xi1>, vector<64x64xf32>
    %36 = arith.subf %6, %11 : vector<64x64xf32>
    %37 = math.exp %36 : vector<64x64xf32>
    %38 = arith.addf %28, %37 : vector<64x64xf32>
    %c2_i32 = arith.constant 2 : i32
    %39 = vector.broadcast %c2_i32 : i32 to vector<64x64xi32>
    %40 = arith.cmpi eq, %0, %39 : vector<64x64xi32>
    %41 = arith.select %40, %37, %31 : vector<64x64xi1>, vector<64x64xf32>
    %42 = arith.select %40, %6, %32 : vector<64x64xi1>, vector<64x64xf32>
    %c2_15 = arith.constant 2 : index
    %43 = memref.load %arg1[%c2_15] : memref<4xf32, #tpu.memory_space<smem>>
    %44 = vector.broadcast %43 : f32 to vector<64x64xf32>
    %45 = arith.select %40, %44, %35 : vector<64x64xi1>, vector<64x64xf32>
    %46 = arith.subf %8, %11 : vector<64x64xf32>
    %47 = math.exp %46 : vector<64x64xf32>
    %48 = arith.addf %38, %47 : vector<64x64xf32>
    %c3_i32 = arith.constant 3 : i32
    %49 = vector.broadcast %c3_i32 : i32 to vector<64x64xi32>
    %50 = arith.cmpi eq, %0, %49 : vector<64x64xi32>
    %51 = arith.select %50, %47, %41 : vector<64x64xi1>, vector<64x64xf32>
    %52 = arith.select %50, %8, %42 : vector<64x64xi1>, vector<64x64xf32>
    %c3_16 = arith.constant 3 : index
    %53 = memref.load %arg1[%c3_16] : memref<4xf32, #tpu.memory_space<smem>>
    %54 = vector.broadcast %53 : f32 to vector<64x64xf32>
    %55 = arith.select %50, %54, %45 : vector<64x64xi1>, vector<64x64xf32>
    %56 = arith.subf %11, %52 : vector<64x64xf32>
    %57 = math.log %48 : vector<64x64xf32>
    %58 = arith.addf %56, %57 : vector<64x64xf32>
    %59 = tpu.reciprocal %48 {approx = true} : vector<64x64xf32> -> vector<64x64xf32>
    %60 = arith.mulf %48, %59 : vector<64x64xf32>
    %cst_17 = arith.constant 2.000000e+00 : f32
    %61 = vector.broadcast %cst_17 : f32 to vector<64x64xf32>
    %62 = arith.subf %61, %60 : vector<64x64xf32>
    %63 = arith.mulf %59, %62 : vector<64x64xf32>
    %64 = arith.mulf %51, %63 : vector<64x64xf32>
    %cst_18 = arith.constant 1.000000e+00 : f32
    %65 = vector.broadcast %cst_18 : f32 to vector<64x64xf32>
    %66 = arith.subf %65, %64 : vector<64x64xf32>
    %67 = arith.mulf %55, %58 : vector<64x64xf32>
    %68 = arith.mulf %66, %66 : vector<64x64xf32>
    %69 = arith.mulf %68, %67 : vector<64x64xf32>
    %cst_19 = arith.constant dense<0.000000e+00> : vector<64xf32>
    %70 = vector.multi_reduction <add>, %67, %cst_19 [0] : vector<64x64xf32> to vector<64xf32>
    %71 = vector.shape_cast %70 : vector<64xf32> to vector<1x64xf32>
    %c0_20 = arith.constant 0 : index
    %c0_21 = arith.constant 0 : index
    %c0_22 = arith.constant 0 : index
    %72 = vector.load %arg4[%c0_20, %c0_21, %c0_22] : memref<1x3x64xf32, #tpu.memory_space<vmem>>, vector<1x1x64xf32>
    %73 = vector.shape_cast %72 : vector<1x1x64xf32> to vector<1x64xf32>
    %74 = vector.shape_cast %71 : vector<1x64xf32> to vector<1x1x64xf32>
    tpu.vector_store %arg4[%c0_20, %c0_21, %c0_22], %74 {strides = array<i32>} : memref<1x3x64xf32, #tpu.memory_space<vmem>>, vector<1x1x64xf32>,
    %cst_23 = arith.constant dense<0.000000e+00> : vector<64xf32>
    %75 = vector.multi_reduction <add>, %55, %cst_23 [0] : vector<64x64xf32> to vector<64xf32>
    %76 = vector.shape_cast %75 : vector<64xf32> to vector<1x64xf32>
    %c0_24 = arith.constant 0 : index
    %c1_25 = arith.constant 1 : index
    %c0_26 = arith.constant 0 : index
    %77 = vector.load %arg4[%c0_24, %c1_25, %c0_26] : memref<1x3x64xf32, #tpu.memory_space<vmem>>, vector<1x1x64xf32>
    %78 = vector.shape_cast %77 : vector<1x1x64xf32> to vector<1x64xf32>
    %79 = vector.shape_cast %76 : vector<1x64xf32> to vector<1x1x64xf32>
    tpu.vector_store %arg4[%c0_24, %c1_25, %c0_26], %79 {strides = array<i32>} : memref<1x3x64xf32, #tpu.memory_space<vmem>>, vector<1x1x64xf32>,
    %cst_27 = arith.constant dense<0.000000e+00> : vector<64xf32>
    %80 = vector.multi_reduction <add>, %69, %cst_27 [0] : vector<64x64xf32> to vector<64xf32>
    %81 = vector.shape_cast %80 : vector<64xf32> to vector<1x64xf32>
    %c0_28 = arith.constant 0 : index
    %c2_29 = arith.constant 2 : index
    %c0_30 = arith.constant 0 : index
    %82 = vector.load %arg4[%c0_28, %c2_29, %c0_30] : memref<1x3x64xf32, #tpu.memory_space<vmem>>, vector<1x1x64xf32>
    %83 = vector.shape_cast %82 : vector<1x1x64xf32> to vector<1x64xf32>
    %84 = vector.shape_cast %81 : vector<1x64xf32> to vector<1x1x64xf32>
    tpu.vector_store %arg4[%c0_28, %c2_29, %c0_30], %84 {strides = array<i32>} : memref<1x3x64xf32, #tpu.memory_space<vmem>>, vector<1x1x64xf32>,
    return
  }
  func.func @transform_0(%arg0: i32) -> i32 {
    %c0_i32 = arith.constant 0 : i32
    %c0_i32_0 = arith.constant 0 : i32
    return %c0_i32 : i32
  }
  func.func @transform_1(%arg0: i32) -> (i32, i32, i32) {
    %c0_i32 = arith.constant 0 : i32
    %c0_i32_0 = arith.constant 0 : i32
    %c0_i32_1 = arith.constant 0 : i32
    return %c0_i32, %arg0, %c0_i32_0 : i32, i32, i32
  }
  func.func @transform_2(%arg0: i32) -> (i32, i32) {
    %c0_i32 = arith.constant 0 : i32
    %c0_i32_0 = arith.constant 0 : i32
    return %arg0, %c0_i32 : i32, i32
  }
  func.func @transform_3(%arg0: i32) -> (i32, i32, i32) {
    %c0_i32 = arith.constant 0 : i32
    %c0_i32_0 = arith.constant 0 : i32
    %c0_i32_1 = arith.constant 0 : i32
    return %arg0, %c0_i32, %c0_i32_0 : i32, i32, i32
  }
}

</mosaic_0001>

<llo_original>
// kernel: tpu_custom_call.1
$region0: #{tpu_custom_call.1}
  #allocation0 [shape = 'u32[]', space=smem, size = 0x4, offset = 0x4, fixed_abs, tag = 'smem constant byte address 0x4 - core index']
  #allocation1 [shape = 'u32[144,128]{1,0:T(1,128)}', space=vmem, size = 0x12000, scoped, tag = 'internal scratch']
  %s0 = inlined_call_operand.hbm [shape: f32[4], index: 0, kind: input, shape index: {}]
  %s1 = inlined_call_operand.hbm [shape: f32[4,64,64], index: 1, kind: input, shape index: {}]
  %s2 = inlined_call_operand.hbm [shape: s32[64,64], index: 2, kind: input, shape index: {}]
  %s3 = inlined_call_operand.vmem [shape: f32[1,3,64], index: 3, kind: output, shape index: {}]
  %s4 = sld [smem:[#allocation0]]
  $region34: #{tpu_custom_call.1} parent=0
    _
  %s6 = ssub.s32 1, %s4
  %s7 = scalar_select 0, %s6, %s4
  $region1: #{tpu_custom_call.1} parent=0
    #allocation2 [shape = 'u8[512]{0}', space=smem, size = 0x200, scoped, tag = 'input window, operand 0, single buffered']
    #allocation3 [shape = 's32[1]{0}', space=sflag, size = 0x4, scoped, tag = 'scoped memory for tpu_custom_call.1']
    #allocation4 [shape = 's32[1]{0}', space=sflag, size = 0x4, scoped, tag = 'scoped memory for tpu_custom_call.1']
    #allocation5 [shape = 'u8[131072]{0}', space=vmem, size = 0x20000, scoped, tag = 'input window, operand 1, single buffered']
    #allocation6 [shape = 'u8[32768]{0}', space=vmem, size = 0x8000, scoped, tag = 'input window, operand 2, single buffered']
    #allocation7 [shape = 's32[1]{0}', space=sflag, size = 0x4, scoped, tag = 'scoped memory for tpu_custom_call.1']
    %8 = vsyncpa [#allocation4], 0
    %9 = vsyncpa [#allocation3], 0
    %10 = vsyncpa [#allocation7], 0
    // Predicated region
    $region2: #{tpu_custom_call.1} parent=1 // pred_check
      _
    $region3: #{tpu_custom_call.1} parent=1 // pred_check_branch
      %12 = sbr.rel (0) target = $region5
    $region4: #{tpu_custom_call.1} parent=1 // pred_region
      %s14 = ssub.s32 16, 16
      %15 = vsyncadd [#allocation4], %s14
      %18 = dma.hbm_to_smem %s0, 16, [#allocation2], [#allocation4]
    $region5: #{tpu_custom_call.1} parent=1 // pred_fallthru
      _
    // Predicated region
    $region6: #{tpu_custom_call.1} parent=1 // pred_check
      _
    $region7: #{tpu_custom_call.1} parent=1 // pred_check_branch
      %20 = sbr.rel (0) target = $region9
    $region8: #{tpu_custom_call.1} parent=1 // pred_region
      %s22 = ssub.s32 4096, 4096
      %23 = vsyncadd [#allocation3], %s22
      %s24 = sshll.u32 [#allocation5], 4
      %s25 = int_to_ptr.vmem [resolvable:$true] %s24
      %30 = dma.hbm_to_vmem [thread:$0]  %s1, 4096, %s25, [#allocation3], 128, 128, 8
    $region9: #{tpu_custom_call.1} parent=1 // pred_fallthru
      _
    // Predicated region
    $region10: #{tpu_custom_call.1} parent=1 // pred_check
      _
    $region11: #{tpu_custom_call.1} parent=1 // pred_check_branch
      %32 = sbr.rel (0) target = $region13
    $region12: #{tpu_custom_call.1} parent=1 // pred_region
      %s34 = ssub.s32 1024, 1024
      %35 = vsyncadd [#allocation7], %s34
      %s36 = sshll.u32 [#allocation6], 4
      %s37 = int_to_ptr.vmem [resolvable:$true] %s36
      %42 = dma.hbm_to_vmem [thread:$0]  %s2, 1024, %s37, [#allocation7], 128, 128, 8
    $region13: #{tpu_custom_call.1} parent=1 // pred_fallthru
      _
    // Predicated region
    $region14: #{tpu_custom_call.1} parent=1 // pred_check
      _
    $region15: #{tpu_custom_call.1} parent=1 // pred_check_branch
      %44 = sbr.rel (0) target = $region17
    $region16: #{tpu_custom_call.1} parent=1 // pred_region
      %45 = dma.done [#allocation4], 16
    $region17: #{tpu_custom_call.1} parent=1 // pred_fallthru
      _
    // Predicated region
    $region18: #{tpu_custom_call.1} parent=1 // pred_check
      _
    $region19: #{tpu_custom_call.1} parent=1 // pred_check_branch
      %47 = sbr.rel (0) target = $region21
    $region20: #{tpu_custom_call.1} parent=1 // pred_region
      %48 = dma.done [#allocation3], 4096
    $region21: #{tpu_custom_call.1} parent=1 // pred_fallthru
      _
    // Predicated region
    $region22: #{tpu_custom_call.1} parent=1 // pred_check
      _
    $region23: #{tpu_custom_call.1} parent=1 // pred_check_branch
      %50 = sbr.rel (0) target = $region25
    $region24: #{tpu_custom_call.1} parent=1 // pred_region
      %51 = dma.done [#allocation7], 1024
    $region25: #{tpu_custom_call.1} parent=1 // pred_fallthru
      _
    %52 = sfence
    %v53 = vld [vmem:[#allocation6] sm:$0xff]
    %v54 = vld [vmem:[#allocation6 + $0x8] sm:$0xff]
    %v55 = vld [vmem:[#allocation6 + $0x10] sm:$0xff]
    %v56 = vld [vmem:[#allocation6 + $0x18] sm:$0xff]
    %v57 = vld [vmem:[#allocation6 + $0x20] sm:$0xff]
    %v58 = vld [vmem:[#allocation6 + $0x28] sm:$0xff]
    %v59 = vld [vmem:[#allocation6 + $0x30] sm:$0xff]
    %v60 = vld [vmem:[#allocation6 + $0x38] sm:$0xff]
    %v61 = vld [vmem:[#allocation5] sm:$0xff]
    %v62 = vld [vmem:[#allocation5 + $0x8] sm:$0xff]
    %v63 = vld [vmem:[#allocation5 + $0x10] sm:$0xff]
    %v64 = vld [vmem:[#allocation5 + $0x18] sm:$0xff]
    %v65 = vld [vmem:[#allocation5 + $0x20] sm:$0xff]
    %v66 = vld [vmem:[#allocation5 + $0x28] sm:$0xff]
    %v67 = vld [vmem:[#allocation5 + $0x30] sm:$0xff]
    %v68 = vld [vmem:[#allocation5 + $0x38] sm:$0xff]
    %s69 = scalar_lea.vmem [#allocation5], 64
    %v70 = vld [vmem:[%s69] sm:$0xff]
    %v71 = vld [vmem:[%s69 + $0x8] sm:$0xff]
    %v72 = vld [vmem:[%s69 + $0x10] sm:$0xff]
    %v73 = vld [vmem:[%s69 + $0x18] sm:$0xff]
    %v74 = vld [vmem:[%s69 + $0x20] sm:$0xff]
    %v75 = vld [vmem:[%s69 + $0x28] sm:$0xff]
    %v76 = vld [vmem:[%s69 + $0x30] sm:$0xff]
    %v77 = vld [vmem:[%s69 + $0x38] sm:$0xff]
    %s78 = scalar_lea.vmem [#allocation5], 128
    %v79 = vld [vmem:[%s78] sm:$0xff]
    %v80 = vld [vmem:[%s78 + $0x8] sm:$0xff]
    %v81 = vld [vmem:[%s78 + $0x10] sm:$0xff]
    %v82 = vld [vmem:[%s78 + $0x18] sm:$0xff]
    %v83 = vld [vmem:[%s78 + $0x20] sm:$0xff]
    %v84 = vld [vmem:[%s78 + $0x28] sm:$0xff]
    %v85 = vld [vmem:[%s78 + $0x30] sm:$0xff]
    %v86 = vld [vmem:[%s78 + $0x38] sm:$0xff]
    %s87 = scalar_lea.vmem [#allocation5], 192
    %v88 = vld [vmem:[%s87] sm:$0xff]
    %v89 = vld [vmem:[%s87 + $0x8] sm:$0xff]
    %v90 = vld [vmem:[%s87 + $0x10] sm:$0xff]
    %v91 = vld [vmem:[%s87 + $0x18] sm:$0xff]
    %v92 = vld [vmem:[%s87 + $0x20] sm:$0xff]
    %v93 = vld [vmem:[%s87 + $0x28] sm:$0xff]
    %v94 = vld [vmem:[%s87 + $0x30] sm:$0xff]
    %v95 = vld [vmem:[%s87 + $0x38] sm:$0xff]
    %v96 = vmax.f32 %v61, %v70
    %v97 = vmax.f32 %v62, %v71
    %v98 = vmax.f32 %v63, %v72
    %v99 = vmax.f32 %v64, %v73
    %v100 = vmax.f32 %v65, %v74
    %v101 = vmax.f32 %v66, %v75
    %v102 = vmax.f32 %v67, %v76
    %v103 = vmax.f32 %v68, %v77
    %v104 = vmax.f32 %v96, %v79
    %v105 = vmax.f32 %v97, %v80
    %v106 = vmax.f32 %v98, %v81
    %v107 = vmax.f32 %v99, %v82
    %v108 = vmax.f32 %v100, %v83
    %v109 = vmax.f32 %v101, %v84
    %v110 = vmax.f32 %v102, %v85
    %v111 = vmax.f32 %v103, %v86
    %v112 = vmax.f32 %v104, %v88
    %v113 = vmax.f32 %v105, %v89
    %v114 = vmax.f32 %v106, %v90
    %v115 = vmax.f32 %v107, %v91
    %v116 = vmax.f32 %v108, %v92
    %v117 = vmax.f32 %v109, %v93
    %v118 = vmax.f32 %v110, %v94
    %v119 = vmax.f32 %v111, %v95
    %v120 = vsub.f32 %v61, %v112
    %v121 = vsub.f32 %v62, %v113
    %v122 = vsub.f32 %v63, %v114
    %v123 = vsub.f32 %v64, %v115
    %v124 = vsub.f32 %v65, %v116
    %v125 = vsub.f32 %v66, %v117
    %v126 = vsub.f32 %v67, %v118
    %v127 = vsub.f32 %v68, %v119
    %v128 = vmul.f32 %v120, 1.442695
    %v129 = vpow.pop %v128
    %v130 = vmul.f32 %v121, 1.442695
    %v131 = vpow.pop %v130
    %v132 = vmul.f32 %v122, 1.442695
    %v133 = vpow.pop %v132
    %v134 = vmul.f32 %v123, 1.442695
    %v135 = vpow.pop %v134
    %v136 = vmul.f32 %v124, 1.442695
    %v137 = vpow.pop %v136
    %v138 = vmul.f32 %v125, 1.442695
    %v139 = vpow.pop %v138
    %v140 = vmul.f32 %v126, 1.442695
    %v141 = vpow.pop %v140
    %v142 = vmul.f32 %v127, 1.442695
    %v143 = vpow.pop %v142
    %v144 = vadd.f32 %v129, 0.0
    %v145 = vadd.f32 %v131, 0.0
    %v146 = vadd.f32 %v133, 0.0
    %v147 = vadd.f32 %v135, 0.0
    %v148 = vadd.f32 %v137, 0.0
    %v149 = vadd.f32 %v139, 0.0
    %v150 = vadd.f32 %v141, 0.0
    %v151 = vadd.f32 %v143, 0.0
    %vm152 = vcmp.eq.s32.totalorder %v53, 0
    %vm153 = vcmp.eq.s32.totalorder %v54, 0
    %vm154 = vcmp.eq.s32.totalorder %v55, 0
    %vm155 = vcmp.eq.s32.totalorder %v56, 0
    %vm156 = vcmp.eq.s32.totalorder %v57, 0
    %vm157 = vcmp.eq.s32.totalorder %v58, 0
    %vm158 = vcmp.eq.s32.totalorder %v59, 0
    %vm159 = vcmp.eq.s32.totalorder %v60, 0
    %v160 = vsel %vm152, %v129, 0.0
    %v161 = vsel %vm153, %v131, 0.0
    %v162 = vsel %vm154, %v133, 0.0
    %v163 = vsel %vm155, %v135, 0.0
    %v164 = vsel %vm156, %v137, 0.0
    %v165 = vsel %vm157, %v139, 0.0
    %v166 = vsel %vm158, %v141, 0.0
    %v167 = vsel %vm159, %v143, 0.0
    %v168 = vsel %vm152, %v61, 0.0
    %v169 = vsel %vm153, %v62, 0.0
    %v170 = vsel %vm154, %v63, 0.0
    %v171 = vsel %vm155, %v64, 0.0
    %v172 = vsel %vm156, %v65, 0.0
    %v173 = vsel %vm157, %v66, 0.0
    %v174 = vsel %vm158, %v67, 0.0
    %v175 = vsel %vm159, %v68, 0.0
    %s176 = sld [smem:[#allocation2]]
    %v177 = vstv %s176
    %v178 = vsel %vm152, %v177, 0.0
    %v179 = vsel %vm153, %v177, 0.0
    %v180 = vsel %vm154, %v177, 0.0
    %v181 = vsel %vm155, %v177, 0.0
    %v182 = vsel %vm156, %v177, 0.0
    %v183 = vsel %vm157, %v177, 0.0
    %v184 = vsel %vm158, %v177, 0.0
    %v185 = vsel %vm159, %v177, 0.0
    %v186 = vsub.f32 %v70, %v112
    %v187 = vsub.f32 %v71, %v113
    %v188 = vsub.f32 %v72, %v114
    %v189 = vsub.f32 %v73, %v115
    %v190 = vsub.f32 %v74, %v116
    %v191 = vsub.f32 %v75, %v117
    %v192 = vsub.f32 %v76, %v118
    %v193 = vsub.f32 %v77, %v119
    %v194 = vmul.f32 %v186, 1.442695
    %v195 = vpow.pop %v194
    %v196 = vmul.f32 %v187, 1.442695
    %v197 = vpow.pop %v196
    %v198 = vmul.f32 %v188, 1.442695
    %v199 = vpow.pop %v198
    %v200 = vmul.f32 %v189, 1.442695
    %v201 = vpow.pop %v200
    %v202 = vmul.f32 %v190, 1.442695
    %v203 = vpow.pop %v202
    %v204 = vmul.f32 %v191, 1.442695
    %v205 = vpow.pop %v204
    %v206 = vmul.f32 %v192, 1.442695
    %v207 = vpow.pop %v206
    %v208 = vmul.f32 %v193, 1.442695
    %v209 = vpow.pop %v208
    %v210 = vadd.f32 %v144, %v195
    %v211 = vadd.f32 %v145, %v197
    %v212 = vadd.f32 %v146, %v199
    %v213 = vadd.f32 %v147, %v201
    %v214 = vadd.f32 %v148, %v203
    %v215 = vadd.f32 %v149, %v205
    %v216 = vadd.f32 %v150, %v207
    %v217 = vadd.f32 %v151, %v209
    %vm218 = vcmp.eq.s32.totalorder %v53, 1
    %vm219 = vcmp.eq.s32.totalorder %v54, 1
    %vm220 = vcmp.eq.s32.totalorder %v55, 1
    %vm221 = vcmp.eq.s32.totalorder %v56, 1
    %vm222 = vcmp.eq.s32.totalorder %v57, 1
    %vm223 = vcmp.eq.s32.totalorder %v58, 1
    %vm224 = vcmp.eq.s32.totalorder %v59, 1
    %vm225 = vcmp.eq.s32.totalorder %v60, 1
    %v226 = vsel %vm218, %v195, %v160
    %v227 = vsel %vm219, %v197, %v161
    %v228 = vsel %vm220, %v199, %v162
    %v229 = vsel %vm221, %v201, %v163
    %v230 = vsel %vm222, %v203, %v164
    %v231 = vsel %vm223, %v205, %v165
    %v232 = vsel %vm224, %v207, %v166
    %v233 = vsel %vm225, %v209, %v167
    %v234 = vsel %vm218, %v70, %v168
    %v235 = vsel %vm219, %v71, %v169
    %v236 = vsel %vm220, %v72, %v170
    %v237 = vsel %vm221, %v73, %v171
    %v238 = vsel %vm222, %v74, %v172
    %v239 = vsel %vm223, %v75, %v173
    %v240 = vsel %vm224, %v76, %v174
    %v241 = vsel %vm225, %v77, %v175
    %s242 = sld [smem:[#allocation2 + $0x1]]
    %v243 = vstv %s242
    %v244 = vsel %vm218, %v243, %v178
    %v245 = vsel %vm219, %v243, %v179
    %v246 = vsel %vm220, %v243, %v180
    %v247 = vsel %vm221, %v243, %v181
    %v248 = vsel %vm222, %v243, %v182
    %v249 = vsel %vm223, %v243, %v183
    %v250 = vsel %vm224, %v243, %v184
    %v251 = vsel %vm225, %v243, %v185
    %v252 = vsub.f32 %v79, %v112
    %v253 = vsub.f32 %v80, %v113
    %v254 = vsub.f32 %v81, %v114
    %v255 = vsub.f32 %v82, %v115
    %v256 = vsub.f32 %v83, %v116
    %v257 = vsub.f32 %v84, %v117
    %v258 = vsub.f32 %v85, %v118
    %v259 = vsub.f32 %v86, %v119
    %v260 = vmul.f32 %v252, 1.442695
    %v261 = vpow.pop %v260
    %v262 = vmul.f32 %v253, 1.442695
    %v263 = vpow.pop %v262
    %v264 = vmul.f32 %v254, 1.442695
    %v265 = vpow.pop %v264
    %v266 = vmul.f32 %v255, 1.442695
    %v267 = vpow.pop %v266
    %v268 = vmul.f32 %v256, 1.442695
    %v269 = vpow.pop %v268
    %v270 = vmul.f32 %v257, 1.442695
    %v271 = vpow.pop %v270
    %v272 = vmul.f32 %v258, 1.442695
    %v273 = vpow.pop %v272
    %v274 = vmul.f32 %v259, 1.442695
    %v275 = vpow.pop %v274
    %v276 = vadd.f32 %v210, %v261
    %v277 = vadd.f32 %v211, %v263
    %v278 = vadd.f32 %v212, %v265
    %v279 = vadd.f32 %v213, %v267
    %v280 = vadd.f32 %v214, %v269
    %v281 = vadd.f32 %v215, %v271
    %v282 = vadd.f32 %v216, %v273
    %v283 = vadd.f32 %v217, %v275
    %vm284 = vcmp.eq.s32.totalorder %v53, 2
    %vm285 = vcmp.eq.s32.totalorder %v54, 2
    %vm286 = vcmp.eq.s32.totalorder %v55, 2
    %vm287 = vcmp.eq.s32.totalorder %v56, 2
    %vm288 = vcmp.eq.s32.totalorder %v57, 2
    %vm289 = vcmp.eq.s32.totalorder %v58, 2
    %vm290 = vcmp.eq.s32.totalorder %v59, 2
    %vm291 = vcmp.eq.s32.totalorder %v60, 2
    %v292 = vsel %vm284, %v261, %v226
    %v293 = vsel %vm285, %v263, %v227
    %v294 = vsel %vm286, %v265, %v228
    %v295 = vsel %vm287, %v267, %v229
    %v296 = vsel %vm288, %v269, %v230
    %v297 = vsel %vm289, %v271, %v231
    %v298 = vsel %vm290, %v273, %v232
    %v299 = vsel %vm291, %v275, %v233
    %v300 = vsel %vm284, %v79, %v234
    %v301 = vsel %vm285, %v80, %v235
    %v302 = vsel %vm286, %v81, %v236
    %v303 = vsel %vm287, %v82, %v237
    %v304 = vsel %vm288, %v83, %v238
    %v305 = vsel %vm289, %v84, %v239
    %v306 = vsel %vm290, %v85, %v240
    %v307 = vsel %vm291, %v86, %v241
    %s308 = sld [smem:[#allocation2 + $0x2]]
    %v309 = vstv %s308
    %v310 = vsel %vm284, %v309, %v244
    %v311 = vsel %vm285, %v309, %v245
    %v312 = vsel %vm286, %v309, %v246
    %v313 = vsel %vm287, %v309, %v247
    %v314 = vsel %vm288, %v309, %v248
    %v315 = vsel %vm289, %v309, %v249
    %v316 = vsel %vm290, %v309, %v250
    %v317 = vsel %vm291, %v309, %v251
    %v318 = vsub.f32 %v88, %v112
    %v319 = vsub.f32 %v89, %v113
    %v320 = vsub.f32 %v90, %v114
    %v321 = vsub.f32 %v91, %v115
    %v322 = vsub.f32 %v92, %v116
    %v323 = vsub.f32 %v93, %v117
    %v324 = vsub.f32 %v94, %v118
    %v325 = vsub.f32 %v95, %v119
    %v326 = vmul.f32 %v318, 1.442695
    %v327 = vpow.pop %v326
    %v328 = vmul.f32 %v319, 1.442695
    %v329 = vpow.pop %v328
    %v330 = vmul.f32 %v320, 1.442695
    %v331 = vpow.pop %v330
    %v332 = vmul.f32 %v321, 1.442695
    %v333 = vpow.pop %v332
    %v334 = vmul.f32 %v322, 1.442695
    %v335 = vpow.pop %v334
    %v336 = vmul.f32 %v323, 1.442695
    %v337 = vpow.pop %v336
    %v338 = vmul.f32 %v324, 1.442695
    %v339 = vpow.pop %v338
    %v340 = vmul.f32 %v325, 1.442695
    %v341 = vpow.pop %v340
    %v342 = vadd.f32 %v276, %v327
    %v343 = vadd.f32 %v277, %v329
    %v344 = vadd.f32 %v278, %v331
    %v345 = vadd.f32 %v279, %v333
    %v346 = vadd.f32 %v280, %v335
    %v347 = vadd.f32 %v281, %v337
    %v348 = vadd.f32 %v282, %v339
    %v349 = vadd.f32 %v283, %v341
    %vm350 = vcmp.eq.s32.totalorder %v53, 3
    %vm351 = vcmp.eq.s32.totalorder %v54, 3
    %vm352 = vcmp.eq.s32.totalorder %v55, 3
    %vm353 = vcmp.eq.s32.totalorder %v56, 3
    %vm354 = vcmp.eq.s32.totalorder %v57, 3
    %vm355 = vcmp.eq.s32.totalorder %v58, 3
    %vm356 = vcmp.eq.s32.totalorder %v59, 3
    %vm357 = vcmp.eq.s32.totalorder %v60, 3
    %v358 = vsel %vm350, %v327, %v292
    %v359 = vsel %vm351, %v329, %v293
    %v360 = vsel %vm352, %v331, %v294
    %v361 = vsel %vm353, %v333, %v295
    %v362 = vsel %vm354, %v335, %v296
    %v363 = vsel %vm355, %v337, %v297
    %v364 = vsel %vm356, %v339, %v298
    %v365 = vsel %vm357, %v341, %v299
    %v366 = vsel %vm350, %v88, %v300
    %v367 = vsel %vm351, %v89, %v301
    %v368 = vsel %vm352, %v90, %v302
    %v369 = vsel %vm353, %v91, %v303
    %v370 = vsel %vm354, %v92, %v304
    %v371 = vsel %vm355, %v93, %v305
    %v372 = vsel %vm356, %v94, %v306
    %v373 = vsel %vm357, %v95, %v307
    %s374 = sld [smem:[#allocation2 + $0x3]]
    %v375 = vstv %s374
    %v376 = vsel %vm350, %v375, %v310
    %v377 = vsel %vm351, %v375, %v311
    %v378 = vsel %vm352, %v375, %v312
    %v379 = vsel %vm353, %v375, %v313
    %v380 = vsel %vm354, %v375, %v314
    %v381 = vsel %vm355, %v375, %v315
    %v382 = vsel %vm356, %v375, %v316
    %v383 = vsel %vm357, %v375, %v317
    %v384 = vsub.f32 %v112, %v366
    %v385 = vsub.f32 %v113, %v367
    %v386 = vsub.f32 %v114, %v368
    %v387 = vsub.f32 %v115, %v369
    %v388 = vsub.f32 %v116, %v370
    %v389 = vsub.f32 %v117, %v371
    %v390 = vsub.f32 %v118, %v372
    %v391 = vsub.f32 %v119, %v373
    %v392 = vlog2.pop %v342
    %v393 = vmul.f32 %v392, 0.6931472
    %v394 = vlog2.pop %v343
    %v395 = vmul.f32 %v394, 0.6931472
    %v396 = vlog2.pop %v344
    %v397 = vmul.f32 %v396, 0.6931472
    %v398 = vlog2.pop %v345
    %v399 = vmul.f32 %v398, 0.6931472
    %v400 = vlog2.pop %v346
    %v401 = vmul.f32 %v400, 0.6931472
    %v402 = vlog2.pop %v347
    %v403 = vmul.f32 %v402, 0.6931472
    %v404 = vlog2.pop %v348
    %v405 = vmul.f32 %v404, 0.6931472
    %v406 = vlog2.pop %v349
    %v407 = vmul.f32 %v406, 0.6931472
    %v408 = vadd.f32 %v384, %v393
    %v409 = vadd.f32 %v385, %v395
    %v410 = vadd.f32 %v386, %v397
    %v411 = vadd.f32 %v387, %v399
    %v412 = vadd.f32 %v388, %v401
    %v413 = vadd.f32 %v389, %v403
    %v414 = vadd.f32 %v390, %v405
    %v415 = vadd.f32 %v391, %v407
    %v416 = vrcp.pop %v342
    %v417 = vrcp.pop %v343
    %v418 = vrcp.pop %v344
    %v419 = vrcp.pop %v345
    %v420 = vrcp.pop %v346
    %v421 = vrcp.pop %v347
    %v422 = vrcp.pop %v348
    %v423 = vrcp.pop %v349
    %v424 = vmul.f32 %v342, %v416
    %v425 = vmul.f32 %v343, %v417
    %v426 = vmul.f32 %v344, %v418
    %v427 = vmul.f32 %v345, %v419
    %v428 = vmul.f32 %v346, %v420
    %v429 = vmul.f32 %v347, %v421
    %v430 = vmul.f32 %v348, %v422
    %v431 = vmul.f32 %v349, %v423
    %v432 = vsub.f32 2.0, %v424
    %v433 = vsub.f32 2.0, %v425
    %v434 = vsub.f32 2.0, %v426
    %v435 = vsub.f32 2.0, %v427
    %v436 = vsub.f32 2.0, %v428
    %v437 = vsub.f32 2.0, %v429
    %v438 = vsub.f32 2.0, %v430
    %v439 = vsub.f32 2.0, %v431
    %v440 = vmul.f32 %v416, %v432
    %v441 = vmul.f32 %v417, %v433
    %v442 = vmul.f32 %v418, %v434
    %v443 = vmul.f32 %v419, %v435
    %v444 = vmul.f32 %v420, %v436
    %v445 = vmul.f32 %v421, %v437
    %v446 = vmul.f32 %v422, %v438
    %v447 = vmul.f32 %v423, %v439
    %v448 = vmul.f32 %v358, %v440
    %v449 = vmul.f32 %v359, %v441
    %v450 = vmul.f32 %v360, %v442
    %v451 = vmul.f32 %v361, %v443
    %v452 = vmul.f32 %v362, %v444
    %v453 = vmul.f32 %v363, %v445
    %v454 = vmul.f32 %v364, %v446
    %v455 = vmul.f32 %v365, %v447
    %v456 = vsub.f32 1.0, %v448
    %v457 = vsub.f32 1.0, %v449
    %v458 = vsub.f32 1.0, %v450
    %v459 = vsub.f32 1.0, %v451
    %v460 = vsub.f32 1.0, %v452
    %v461 = vsub.f32 1.0, %v453
    %v462 = vsub.f32 1.0, %v454
    %v463 = vsub.f32 1.0, %v455
    %v464 = vmul.f32 %v376, %v408
    %v465 = vmul.f32 %v377, %v409
    %v466 = vmul.f32 %v378, %v410
    %v467 = vmul.f32 %v379, %v411
    %v468 = vmul.f32 %v380, %v412
    %v469 = vmul.f32 %v381, %v413
    %v470 = vmul.f32 %v382, %v414
    %v471 = vmul.f32 %v383, %v415
    %v472 = vmul.f32 %v456, %v456
    %v473 = vmul.f32 %v457, %v457
    %v474 = vmul.f32 %v458, %v458
    %v475 = vmul.f32 %v459, %v459
    %v476 = vmul.f32 %v460, %v460
    %v477 = vmul.f32 %v461, %v461
    %v478 = vmul.f32 %v462, %v462
    %v479 = vmul.f32 %v463, %v463
    %v480 = vmul.f32 %v472, %v464
    %v481 = vmul.f32 %v473, %v465
    %v482 = vmul.f32 %v474, %v466
    %v483 = vmul.f32 %v475, %v467
    %v484 = vmul.f32 %v476, %v468
    %v485 = vmul.f32 %v477, %v469
    %v486 = vmul.f32 %v478, %v470
    %v487 = vmul.f32 %v479, %v471
    %vm488 = vcmask 523264
    %v489 = vsel %vm488, %v464, 0.0
    %v490 = vsel %vm488, %v465, 0.0
    %v491 = vadd.f32 %v489, %v490
    %v492 = vsel %vm488, %v466, 0.0
    %v493 = vadd.f32 %v491, %v492
    %v494 = vsel %vm488, %v467, 0.0
    %v495 = vadd.f32 %v493, %v494
    %v496 = vsel %vm488, %v468, 0.0
    %v497 = vadd.f32 %v495, %v496
    %v498 = vsel %vm488, %v469, 0.0
    %v499 = vadd.f32 %v497, %v498
    %v500 = vsel %vm488, %v470, 0.0
    %v501 = vadd.f32 %v499, %v500
    %v502 = vsel %vm488, %v471, 0.0
    %v503 = vadd.f32 %v501, %v502
    %v504 = vrot.slane %v503, 4
    %v505 = vadd.f32 %v503, %v504
    %v506 = vrot.slane %v505, 2
    %v507 = vadd.f32 %v505, %v506
    %v508 = vrot.slane %v507, 1
    %v509 = vadd.f32 %v507, %v508
    %vm510 = vcmask 516096
    %511 = vst.msk [vmem:[%s3] sm:$0x1] %vm510, %v509
    %v512 = vsel %vm488, %v376, 0.0
    %v513 = vsel %vm488, %v377, 0.0
    %v514 = vadd.f32 %v512, %v513
    %v515 = vsel %vm488, %v378, 0.0
    %v516 = vadd.f32 %v514, %v515
    %v517 = vsel %vm488, %v379, 0.0
    %v518 = vadd.f32 %v516, %v517
    %v519 = vsel %vm488, %v380, 0.0
    %v520 = vadd.f32 %v518, %v519
    %v521 = vsel %vm488, %v381, 0.0
    %v522 = vadd.f32 %v520, %v521
    %v523 = vsel %vm488, %v382, 0.0
    %v524 = vadd.f32 %v522, %v523
    %v525 = vsel %vm488, %v383, 0.0
    %v526 = vadd.f32 %v524, %v525
    %v527 = vrot.slane %v526, 4
    %v528 = vadd.f32 %v526, %v527
    %v529 = vrot.slane %v528, 2
    %v530 = vadd.f32 %v528, %v529
    %v531 = vrot.slane %v530, 1
    %v532 = vadd.f32 %v530, %v531
    %533 = vst.msk [vmem:[%s3 + $0x1] sm:$0x1] %vm510, %v532
    %v534 = vsel %vm488, %v480, 0.0
    %v535 = vsel %vm488, %v481, 0.0
    %v536 = vadd.f32 %v534, %v535
    %v537 = vsel %vm488, %v482, 0.0
    %v538 = vadd.f32 %v536, %v537
    %v539 = vsel %vm488, %v483, 0.0
    %v540 = vadd.f32 %v538, %v539
    %v541 = vsel %vm488, %v484, 0.0
    %v542 = vadd.f32 %v540, %v541
    %v543 = vsel %vm488, %v485, 0.0
    %v544 = vadd.f32 %v542, %v543
    %v545 = vsel %vm488, %v486, 0.0
    %v546 = vadd.f32 %v544, %v545
    %v547 = vsel %vm488, %v487, 0.0
    %v548 = vadd.f32 %v546, %v547
    %v549 = vrot.slane %v548, 4
    %v550 = vadd.f32 %v548, %v549
    %v551 = vrot.slane %v550, 2
    %v552 = vadd.f32 %v550, %v551
    %v553 = vrot.slane %v552, 1
    %v554 = vadd.f32 %v552, %v553
    %555 = vst.msk [vmem:[%s3 + $0x2] sm:$0x1] %vm510, %v554
    // Predicated region
    $region26: #{tpu_custom_call.1} parent=1 // pred_check
      _
    $region27: #{tpu_custom_call.1} parent=1 // pred_check_branch
      %557 = sbr.rel (0) target = $region29
    $region28: #{tpu_custom_call.1} parent=1 // pred_region
      _
    $region29: #{tpu_custom_call.1} parent=1 // pred_fallthru
      _
    // Predicated region
    $region30: #{tpu_custom_call.1} parent=1 // pred_check
      _
    $region31: #{tpu_custom_call.1} parent=1 // pred_check_branch
      %559 = sbr.rel (0) target = $region33
    $region32: #{tpu_custom_call.1} parent=1 // pred_region
      _
    $region33: #{tpu_custom_call.1} parent=1 // pred_fallthru
      _
    %560 = vsyncpa [#allocation3], 1
    %561 = vsyncpa [#allocation7], 1
    %562 = vsyncpa [#allocation4], 1

</llo_original>
